<compile_context>
chip_gen: v5e
topology: v5e:2x2
jax: 0.10.0
libtpu: 0.0.40
codegen_flags: <defaults>
</compile_context>

<pallas_src>
import jax
import jax.numpy as jnp
from jax.experimental import pallas as pl
from jax.experimental.pallas import tpu as pltpu

D_EMBED = 300
N_LABELS = 2            # len(LABELS)
N_PAD = 128             # lane-dense output / weight width


def _round_up(n, m):
    return ((n + m - 1) // m) * m


def _vmem_capacity_bytes():
    """Per-core VMEM capacity; conservative v7x value (64 MiB) if unknown."""
    cap = 64 << 20
    try:
        info = pltpu.get_tpu_info()
        q = int(getattr(info, "vmem_capacity_bytes", 0) or 0)
        if q > 0:
            cap = q
    except Exception:
        pass
    # clamp to sane per-core range (v7x=64 MiB, v5e/v6e=128 MiB)
    return max(32 << 20, min(cap, 128 << 20))


def _pick_batch_tile(B, S, D, x_itemsize, m_itemsize, mask2d, vmem_cap):
    """Largest batch tile that (a) fits the VMEM budget double-buffered with
    headroom for the in-kernel f32 masked-product temporary, (b) keeps >=2 grid
    steps when the batch allows it (v7x has 2 TensorCores), (c) never exceeds
    the 8-rounded batch."""
    if B < 8:
        return max(B, 1)          # full-dim blocks, no ragged edge at all
    s_pad = _round_up(S, 8)
    d_lane = _round_up(D, 128)    # 300 -> 384 lane padding in VMEM
    x_row = s_pad * d_lane * x_itemsize        # one pipeline buffer row
    x_tmp_row = s_pad * d_lane * 4             # f32 upcast / masked-product temp
    if mask2d:
        m_row = _round_up(S, 128) * m_itemsize
    else:
        m_row = s_pad * 128 * m_itemsize       # (S,1) block lane-pads to 128
    o_row = N_PAD * 4
    per_row = 2 * x_row + x_tmp_row + 2 * m_row + 2 * o_row
    budget = int(0.70 * vmem_cap) - (2 << 20)  # headroom: weights, compiler scratch
    tb = max(8, (budget // per_row) // 8 * 8)
    # keep >= 2 grid steps so both v7x TensorCores get work
    tb = min(tb, max(8, _round_up(pl.cdiv(B, 2), 8)))
    tb = min(tb, _round_up(B, 8))
    return tb
    # TODO(synk): for extremely long sequences add a second "arbitrary" grid
    # axis over S with a (tb, D) accumulator scratch instead of a full-S tile.


def _w2v_kernel_mask2d(x_ref, mask_ref, w_ref, b_ref, o_ref):
    # x_ref: (TB,S,D)  mask_ref: (TB,S)  w_ref: (D,128)  b_ref: (1,128)  o_ref: (TB,128)
    x = x_ref[...].astype(jnp.float32)
    m = mask_ref[...].astype(jnp.float32)
    pooled = jnp.sum(x * m[:, :, None], axis=1)                   # (TB, D)
    logits = jnp.dot(pooled, w_ref[...],
                     preferred_element_type=jnp.float32) + b_ref[...]
    o_ref[...] = jnp.maximum(logits, 0.0)


def _w2v_kernel_mask3d(x_ref, mask_ref, w_ref, b_ref, o_ref):
    # Fallback path: mask arrives pre-shaped (TB, S, 1) from the host.
    x = x_ref[...].astype(jnp.float32)
    m = mask_ref[...].astype(jnp.float32)
    pooled = jnp.sum(x * m, axis=1)                               # (TB, D)
    logits = jnp.dot(pooled, w_ref[...],
                     preferred_element_type=jnp.float32) + b_ref[...]
    o_ref[...] = jnp.maximum(logits, 0.0)


def _reference_forward(x, mask, w, b):
    masked = x.astype(jnp.float32) * mask.astype(jnp.float32)[:, :, None]
    pooled = jnp.sum(masked, axis=1)
    logits = pooled @ w.astype(jnp.float32) + jnp.asarray(b, jnp.float32).reshape(-1)
    return jnp.maximum(logits, 0.0)


def _forward_impl(x, mask, w, b, *, mask2d):
    B, S, D = x.shape
    n_labels = w.shape[1]
    assert n_labels <= N_PAD

    # Lane-dense (128-wide) padded weight / bias: extra columns are zero, so
    # padded logits are relu(0) = 0 and are sliced away below.
    w_pad = jnp.zeros((D, N_PAD), jnp.float32).at[:, :n_labels].set(
        w.astype(jnp.float32))
    b_pad = jnp.zeros((1, N_PAD), jnp.float32).at[0, :n_labels].set(
        jnp.asarray(b, jnp.float32).reshape(-1))

    vmem_cap = _vmem_capacity_bytes()
    tb = _pick_batch_tile(B, S, D, x.dtype.itemsize, mask.dtype.itemsize,
                          mask2d, vmem_cap)
    grid = (pl.cdiv(B, tb),)   # ragged last tile: OOB reads discarded per-row,
                               # OOB output rows dropped -> no host jnp.pad copy.

    if mask2d:
        mask_in = mask                                             # (B, S)
        mask_spec = pl.BlockSpec((tb, S), lambda i: (i, 0))
        kernel = _w2v_kernel_mask2d
    else:
        mask_in = mask[..., None]                                  # (B, S, 1)
        mask_spec = pl.BlockSpec((tb, S, 1), lambda i: (i, 0, 0))
        kernel = _w2v_kernel_mask3d

    out_padded = pl.pallas_call(
        kernel,
        out_shape=jax.ShapeDtypeStruct((B, N_PAD), jnp.float32),
        grid_spec=pltpu.PrefetchScalarGridSpec(
            num_scalar_prefetch=0,
            grid=grid,
            in_specs=[
                pl.BlockSpec((tb, S, D), lambda i: (i, 0, 0)),     # x tile
                mask_spec,                                         # mask tile
                pl.BlockSpec((D, N_PAD), lambda i: (0, 0)),        # weight, resident
                pl.BlockSpec((1, N_PAD), lambda i: (0, 0)),        # bias, resident
            ],
            out_specs=pl.BlockSpec((tb, N_PAD), lambda i: (i, 0)), # lane-dense out
        ),
        compiler_params=pltpu.CompilerParams(
            dimension_semantics=("parallel",),
            vmem_limit_bytes=min(int(0.9 * vmem_cap), 100 << 20),
        ),
    )(x, mask_in, w_pad, b_pad)

    return out_padded[:, :n_labels]


# One-time probe: use the 2-D mask + in-kernel broadcast when Mosaic lowers it
# correctly; otherwise fall back to the proven host-side (B, S, 1) mask layout.
_MASK2D_OK = None


def _mask2d_supported(x, mask, w, b):
    global _MASK2D_OK
    if _MASK2D_OK is None:
        try:
            nb = min(x.shape[0], 8)
            got = _forward_impl(x[:nb], mask[:nb], w, b, mask2d=True)
            ref = _reference_forward(x[:nb], mask[:nb], w, b)
            _MASK2D_OK = bool(jnp.allclose(got, ref, atol=1e-3, rtol=1e-3))
        except Exception:
            _MASK2D_OK = False
    return _MASK2D_OK


def word2vec_classifier_forward(x, mask, w, b):
    """Word2VecClassifier.forward (regression + sum pooling, eval-mode dropout).

    x: (B, S, 300) float, mask: (B, S) float, w: (300, n_labels), b: (n_labels,).
    """
    return _forward_impl(x, mask, w, b, mask2d=_mask2d_supported(x, mask, w, b))


if __name__ == "__main__":
    key = jax.random.PRNGKey(0)
    k_x, k_m, k_w, k_b = jax.random.split(key, 4)

    B, S = 2, 8
    x = jax.random.normal(k_x, (B, S, D_EMBED), dtype=jnp.float32)
    # binary attention mask (float, like the PyTorch usage)
    mask = (jax.random.uniform(k_m, (B, S)) > 0.3).astype(jnp.float32)

    # Deterministic Linear(300, 2) init (PyTorch-style uniform +/- 1/sqrt(fan_in)),
    # stored transposed as (D, N_LABELS).
    bound = 1.0 / jnp.sqrt(jnp.float32(D_EMBED))
    w = jax.random.uniform(k_w, (D_EMBED, N_LABELS), minval=-bound, maxval=bound,
                           dtype=jnp.float32)
    b = jax.random.uniform(k_b, (N_LABELS,), minval=-bound, maxval=bound,
                           dtype=jnp.float32)

    out = word2vec_classifier_forward(x, mask, w, b)
    out = jax.block_until_ready(out)

    ref = _reference_forward(x, mask, w, b)
    assert out.shape == (B, N_LABELS), out.shape
    assert jnp.allclose(out, ref, atol=1e-4, rtol=1e-4), (out, ref)

    # TODO(synk): the 'lstm' classification branch (nn.LSTM), the 'average'/'max'
    # pooling variants and training-mode dropout are not mapped to Pallas; only
    # the default 'regression' + 'sum' eval path is implemented.
    print("KERNEL_OK")
</pallas_src>

<mosaic_0001>
module attributes {stable_mosaic.version = 11 : i64} {
  func.func @_w2v_kernel_mask2d(%arg0: i32, %arg1: memref<2x8x300xf32, #tpu.memory_space<vmem>>, %arg2: memref<2x8xf32, #tpu.memory_space<vmem>>, %arg3: memref<300x128xf32, #tpu.memory_space<vmem>>, %arg4: memref<1x128xf32, #tpu.memory_space<vmem>>, %arg5: memref<2x128xf32, #tpu.memory_space<vmem>>) attributes {dimension_semantics = [#tpu.dimension_semantics<parallel>], iteration_bounds = array<i64: 1>, scalar_prefetch = 0 : i64, scratch_operands = 0 : i64, tpu.core_type = #tpu.core_type<tc>, window_params = [{transform_indices = @transform_0, window_bounds = array<i64: 2, 8, 300>}, {transform_indices = @transform_1, window_bounds = array<i64: 2, 8>}, {pipeline_mode = #tpu.pipeline_mode<synchronous>, transform_indices = @transform_2, window_bounds = array<i64: 300, 128>}, {pipeline_mode = #tpu.pipeline_mode<synchronous>, transform_indices = @transform_3, window_bounds = array<i64: 1, 128>}, {transform_indices = @transform_4, window_bounds = array<i64: 2, 128>}]} {
    %c0 = arith.constant 0 : index
    %c0_0 = arith.constant 0 : index
    %c0_1 = arith.constant 0 : index
    %0 = vector.load %arg1[%c0, %c0_0, %c0_1] : memref<2x8x300xf32, #tpu.memory_space<vmem>>, vector<2x8x300xf32>
    %c0_2 = arith.constant 0 : index
    %c0_3 = arith.constant 0 : index
    %1 = vector.load %arg2[%c0_2, %c0_3] : memref<2x8xf32, #tpu.memory_space<vmem>>, vector<2x8xf32>
    %2 = vector.shape_cast %1 : vector<2x8xf32> to vector<2x8x1xf32>
    %3 = vector.broadcast %2 : vector<2x8x1xf32> to vector<2x8x300xf32>
    %4 = arith.mulf %0, %3 : vector<2x8x300xf32>
    %cst = arith.constant dense<0.000000e+00> : vector<2x300xf32>
    %5 = vector.multi_reduction <add>, %4, %cst [1] : vector<2x8x300xf32> to vector<2x300xf32>
    %c0_4 = arith.constant 0 : index
    %c0_5 = arith.constant 0 : index
    %6 = vector.load %arg3[%c0_4, %c0_5] : memref<300x128xf32, #tpu.memory_space<vmem>>, vector<300x128xf32>
    %cst_6 = arith.constant dense<0.000000e+00> : vector<2x128xf32>
    %7 = tpu.matmul %5, %6, %cst_6 {dimension_numbers = #tpu.dot_dimension_numbers<[1], [0], [0], [1], [0, 0, 1, 1], [], []>} : vector<2x300xf32>, vector<300x128xf32>, vector<2x128xf32> -> vector<2x128xf32>
    %c0_7 = arith.constant 0 : index
    %c0_8 = arith.constant 0 : index
    %8 = vector.load %arg4[%c0_7, %c0_8] : memref<1x128xf32, #tpu.memory_space<vmem>>, vector<1x128xf32>
    %9 = vector.broadcast %8 : vector<1x128xf32> to vector<2x128xf32>
    %10 = arith.addf %7, %9 : vector<2x128xf32>
    %cst_9 = arith.constant 0.000000e+00 : f32
    %11 = vector.broadcast %cst_9 : f32 to vector<2x128xf32>
    %12 = arith.maximumf %10, %11 : vector<2x128xf32>
    %c0_10 = arith.constant 0 : index
    %c0_11 = arith.constant 0 : index
    %13 = vector.load %arg5[%c0_10, %c0_11] : memref<2x128xf32, #tpu.memory_space<vmem>>, vector<2x128xf32>
    tpu.vector_store %arg5[%c0_10, %c0_11], %12 {strides = array<i32>} : memref<2x128xf32, #tpu.memory_space<vmem>>, vector<2x128xf32>,
    return
  }
  func.func @transform_0(%arg0: i32) -> (i32, i32, i32) {
    %c0_i32 = arith.constant 0 : i32
    %c0_i32_0 = arith.constant 0 : i32
    %c0_i32_1 = arith.constant 0 : i32
    return %arg0, %c0_i32, %c0_i32_0 : i32, i32, i32
  }
  func.func @transform_1(%arg0: i32) -> (i32, i32) {
    %c0_i32 = arith.constant 0 : i32
    %c0_i32_0 = arith.constant 0 : i32
    return %arg0, %c0_i32 : i32, i32
  }
  func.func @transform_2(%arg0: i32) -> (i32, i32) {
    %c0_i32 = arith.constant 0 : i32
    %c0_i32_0 = arith.constant 0 : i32
    %c0_i32_1 = arith.constant 0 : i32
    return %c0_i32, %c0_i32_0 : i32, i32
  }
  func.func @transform_3(%arg0: i32) -> (i32, i32) {
    %c0_i32 = arith.constant 0 : i32
    %c0_i32_0 = arith.constant 0 : i32
    %c0_i32_1 = arith.constant 0 : i32
    return %c0_i32, %c0_i32_0 : i32, i32
  }
  func.func @transform_4(%arg0: i32) -> (i32, i32) {
    %c0_i32 = arith.constant 0 : i32
    %c0_i32_0 = arith.constant 0 : i32
    return %arg0, %c0_i32 : i32, i32
  }
}

module attributes {stable_mosaic.version = 11 : i64} {
  func.func @_w2v_kernel_mask3d(%arg0: i32, %arg1: memref<2x8x300xf32, #tpu.memory_space<vmem>>, %arg2: memref<2x8x1xf32, #tpu.memory_space<vmem>>, %arg3: memref<300x128xf32, #tpu.memory_space<vmem>>, %arg4: memref<1x128xf32, #tpu.memory_space<vmem>>, %arg5: memref<2x128xf32, #tpu.memory_space<vmem>>) attributes {dimension_semantics = [#tpu.dimension_semantics<parallel>], iteration_bounds = array<i64: 1>, scalar_prefetch = 0 : i64, scratch_operands = 0 : i64, tpu.core_type = #tpu.core_type<tc>, window_params = [{transform_indices = @transform_0, window_bounds = array<i64: 2, 8, 300>}, {transform_indices = @transform_1, window_bounds = array<i64: 2, 8, 1>}, {pipeline_mode = #tpu.pipeline_mode<synchronous>, transform_indices = @transform_2, window_bounds = array<i64: 300, 128>}, {pipeline_mode = #tpu.pipeline_mode<synchronous>, transform_indices = @transform_3, window_bounds = array<i64: 1, 128>}, {transform_indices = @transform_4, window_bounds = array<i64: 2, 128>}]} {
    %c0 = arith.constant 0 : index
    %c0_0 = arith.constant 0 : index
    %c0_1 = arith.constant 0 : index
    %0 = vector.load %arg1[%c0, %c0_0, %c0_1] : memref<2x8x300xf32, #tpu.memory_space<vmem>>, vector<2x8x300xf32>
    %c0_2 = arith.constant 0 : index
    %c0_3 = arith.constant 0 : index
    %c0_4 = arith.constant 0 : index
    %1 = vector.load %arg2[%c0_2, %c0_3, %c0_4] : memref<2x8x1xf32, #tpu.memory_space<vmem>>, vector<2x8x1xf32>
    %2 = vector.broadcast %1 : vector<2x8x1xf32> to vector<2x8x300xf32>
    %3 = arith.mulf %0, %2 : vector<2x8x300xf32>
    %cst = arith.constant dense<0.000000e+00> : vector<2x300xf32>
    %4 = vector.multi_reduction <add>, %3, %cst [1] : vector<2x8x300xf32> to vector<2x300xf32>
    %c0_5 = arith.constant 0 : index
    %c0_6 = arith.constant 0 : index
    %5 = vector.load %arg3[%c0_5, %c0_6] : memref<300x128xf32, #tpu.memory_space<vmem>>, vector<300x128xf32>
    %cst_7 = arith.constant dense<0.000000e+00> : vector<2x128xf32>
    %6 = tpu.matmul %4, %5, %cst_7 {dimension_numbers = #tpu.dot_dimension_numbers<[1], [0], [0], [1], [0, 0, 1, 1], [], []>} : vector<2x300xf32>, vector<300x128xf32>, vector<2x128xf32> -> vector<2x128xf32>
    %c0_8 = arith.constant 0 : index
    %c0_9 = arith.constant 0 : index
    %7 = vector.load %arg4[%c0_8, %c0_9] : memref<1x128xf32, #tpu.memory_space<vmem>>, vector<1x128xf32>
    %8 = vector.broadcast %7 : vector<1x128xf32> to vector<2x128xf32>
    %9 = arith.addf %6, %8 : vector<2x128xf32>
    %cst_10 = arith.constant 0.000000e+00 : f32
    %10 = vector.broadcast %cst_10 : f32 to vector<2x128xf32>
    %11 = arith.maximumf %9, %10 : vector<2x128xf32>
    %c0_11 = arith.constant 0 : index
    %c0_12 = arith.constant 0 : index
    %12 = vector.load %arg5[%c0_11, %c0_12] : memref<2x128xf32, #tpu.memory_space<vmem>>, vector<2x128xf32>
    tpu.vector_store %arg5[%c0_11, %c0_12], %11 {strides = array<i32>} : memref<2x128xf32, #tpu.memory_space<vmem>>, vector<2x128xf32>,
    return
  }
  func.func @transform_0(%arg0: i32) -> (i32, i32, i32) {
    %c0_i32 = arith.constant 0 : i32
    %c0_i32_0 = arith.constant 0 : i32
    %c0_i32_1 = arith.constant 0 : i32
    return %arg0, %c0_i32, %c0_i32_0 : i32, i32, i32
  }
  func.func @transform_1(%arg0: i32) -> (i32, i32, i32) {
    %c0_i32 = arith.constant 0 : i32
    %c0_i32_0 = arith.constant 0 : i32
    %c0_i32_1 = arith.constant 0 : i32
    return %arg0, %c0_i32, %c0_i32_0 : i32, i32, i32
  }
  func.func @transform_2(%arg0: i32) -> (i32, i32) {
    %c0_i32 = arith.constant 0 : i32
    %c0_i32_0 = arith.constant 0 : i32
    %c0_i32_1 = arith.constant 0 : i32
    return %c0_i32, %c0_i32_0 : i32, i32
  }
  func.func @transform_3(%arg0: i32) -> (i32, i32) {
    %c0_i32 = arith.constant 0 : i32
    %c0_i32_0 = arith.constant 0 : i32
    %c0_i32_1 = arith.constant 0 : i32
    return %c0_i32, %c0_i32_0 : i32, i32
  }
  func.func @transform_4(%arg0: i32) -> (i32, i32) {
    %c0_i32 = arith.constant 0 : i32
    %c0_i32_0 = arith.constant 0 : i32
    return %arg0, %c0_i32 : i32, i32
  }
}

</mosaic_0001>

<llo_original>
// kernel: tpu_custom_call.1
$region0: #{tpu_custom_call.1}
  #allocation0 [shape = 'u32[]', space=smem, size = 0x4, offset = 0x4, fixed_abs, tag = 'smem constant byte address 0x4 - core index']
  #allocation1 [shape = 'u32[72,128]{1,0:T(1,128)}', space=vmem, size = 0x9000, scoped, tag = 'internal scratch']
  %s0 = inlined_call_operand.hbm [shape: f32[2,8,300], index: 0, kind: input, shape index: {}]
  %s1 = inlined_call_operand.hbm [shape: f32[2,8], index: 1, kind: input, shape index: {}]
  %s2 = inlined_call_operand.hbm [shape: f32[300,128], index: 2, kind: input, shape index: {}]
  %s3 = inlined_call_operand.vmem [shape: f32[1,128], index: 3, kind: input, shape index: {}]
  %s4 = inlined_call_operand.hbm [shape: f32[2,128], index: 4, kind: output, shape index: {}]
  %s5 = sld [smem:[#allocation0]]
  $region38: #{tpu_custom_call.1} parent=0
    _
  %s7 = ssub.s32 1, %s5
  %s8 = scalar_select 0, %s7, %s5
  $region1: #{tpu_custom_call.1} parent=0
    #allocation2 [shape = 'u8[24576]{0}', space=vmem, size = 0x6000, scoped, tag = 'input window, operand 0, single buffered']
    #allocation3 [shape = 's32[1]{0}', space=sflag, size = 0x4, scoped, tag = 'scoped memory for tpu_custom_call.1']
    #allocation4 [shape = 's32[1]{0}', space=sflag, size = 0x4, scoped, tag = 'scoped memory for tpu_custom_call.1']
    #allocation5 [shape = 'u8[1024]{0}', space=vmem, size = 0x400, scoped, tag = 'input window, operand 1, single buffered']
    #allocation6 [shape = 's32[1]{0}', space=sflag, size = 0x4, scoped, tag = 'scoped memory for tpu_custom_call.1']
    #allocation7 [shape = 'u8[155648]{0}', space=vmem, size = 0x26000, scoped, tag = 'input window, operand 2, single buffered']
    #allocation8 [shape = 'u8[1024]{0}', space=vmem, size = 0x400, scoped, tag = 'output window, operand 0, single buffered']
    %9 = vsyncpa [#allocation3], 0
    %10 = vsyncpa [#allocation6], 0
    %11 = vsyncpa [#allocation4], 0
    // Predicated region
    $region2: #{tpu_custom_call.1} parent=1 // pred_check
      _
    $region3: #{tpu_custom_call.1} parent=1 // pred_check_branch
      %13 = sbr.rel (0) target = $region5
    $region4: #{tpu_custom_call.1} parent=1 // pred_region
      %15 = vsyncadd [#allocation3], 0
      %s16 = sshll.u32 %s0, 4
      %s17 = int_to_ptr.hbm [resolvable:$true] %s16
      %s18 = sshll.u32 [#allocation2], 4
      %s19 = int_to_ptr.vmem [resolvable:$true] %s18
      %24 = dma.hbm_to_vmem [thread:$0]  %s17, 768, %s19, [#allocation3], 384, 384, 24
    $region5: #{tpu_custom_call.1} parent=1 // pred_fallthru
      _
    // Predicated region
    $region6: #{tpu_custom_call.1} parent=1 // pred_check
      _
    $region7: #{tpu_custom_call.1} parent=1 // pred_check_branch
      %26 = sbr.rel (0) target = $region9
    $region8: #{tpu_custom_call.1} parent=1 // pred_region
      %28 = vsyncadd [#allocation6], 0
      %s30 = sshll.u32 %s1, 4
      %s31 = int_to_ptr.hbm [resolvable:$true] %s30
      %s32 = sshll.u32 [#allocation5], 4
      %s33 = int_to_ptr.vmem [resolvable:$true] %s32
      %35 = dma.hbm_to_vmem [thread:$0]  %s31, 32, %s33, [#allocation6]
    $region9: #{tpu_custom_call.1} parent=1 // pred_fallthru
      _
    // Predicated region
    $region10: #{tpu_custom_call.1} parent=1 // pred_check
      _
    $region11: #{tpu_custom_call.1} parent=1 // pred_check_branch
      %37 = sbr.rel (0) target = $region13
    $region12: #{tpu_custom_call.1} parent=1 // pred_region
      %39 = vsyncadd [#allocation6], 0
      %s40 = sshll.u32 %s2, 4
      %s41 = int_to_ptr.hbm [resolvable:$true] %s40
      %s42 = sshll.u32 [#allocation7], 4
      %s43 = int_to_ptr.vmem [resolvable:$true] %s42
      %48 = dma.hbm_to_vmem [thread:$0]  %s41, 4864, %s43, [#allocation6], 128, 128, 8
    $region13: #{tpu_custom_call.1} parent=1 // pred_fallthru
      _
    // Predicated region
    $region14: #{tpu_custom_call.1} parent=1 // pred_check
      _
    $region15: #{tpu_custom_call.1} parent=1 // pred_check_branch
      %50 = sbr.rel (0) target = $region17
    $region16: #{tpu_custom_call.1} parent=1 // pred_region
      _
    $region17: #{tpu_custom_call.1} parent=1 // pred_fallthru
      _
    // Predicated region
    $region18: #{tpu_custom_call.1} parent=1 // pred_check
      _
    $region19: #{tpu_custom_call.1} parent=1 // pred_check_branch
      %52 = sbr.rel (0) target = $region21
    $region20: #{tpu_custom_call.1} parent=1 // pred_region
      %54 = dma.done [#allocation3], 768
    $region21: #{tpu_custom_call.1} parent=1 // pred_fallthru
      _
    // Predicated region
    $region22: #{tpu_custom_call.1} parent=1 // pred_check
      _
    $region23: #{tpu_custom_call.1} parent=1 // pred_check_branch
      %56 = sbr.rel (0) target = $region25
    $region24: #{tpu_custom_call.1} parent=1 // pred_region
      %58 = dma.done [#allocation6], 32
    $region25: #{tpu_custom_call.1} parent=1 // pred_fallthru
      _
    // Predicated region
    $region26: #{tpu_custom_call.1} parent=1 // pred_check
      _
    $region27: #{tpu_custom_call.1} parent=1 // pred_check_branch
      %60 = sbr.rel (0) target = $region29
    $region28: #{tpu_custom_call.1} parent=1 // pred_region
      %62 = dma.done [#allocation6], 4864
    $region29: #{tpu_custom_call.1} parent=1 // pred_fallthru
      _
    %v63 = vld [vmem:[#allocation2] sm:$0xff]
    %v64 = vld [vmem:[#allocation2 + $0x8] sm:$0xff]
    %v65 = vld [vmem:[#allocation2 + $0x10] sm:$0xff]
    %v66 = vld [vmem:[#allocation2 + $0x18] sm:$0xff]
    %v67 = vld [vmem:[#allocation2 + $0x20] sm:$0xff]
    %v68 = vld [vmem:[#allocation2 + $0x28] sm:$0xff]
    %v69 = vld [vmem:[#allocation5] sm:$0x3]
    %v70 = vperm.slane %v69, 0
    %v71 = vlaneseq
    %v72 = vshrl.u32 %v71, 7
    %74 = vset.pattern.permute.xlu0 %v72
    %75 = vperm.xlu0 %74, %v70
    %v76 = vpop.permute.xlu0 %75
    %v77 = vperm.slane %v69, 1
    %v78 = vlaneseq
    %v79 = vshrl.u32 %v78, 7
    %81 = vset.pattern.permute.xlu0 %v79
    %82 = vperm.xlu0 %81, %v77
    %v83 = vpop.permute.xlu0 %82
    %v84 = vmul.f32 %v63, %v76
    %v85 = vmul.f32 %v64, %v76
    %v86 = vmul.f32 %v65, %v76
    %v87 = vmul.f32 %v66, %v83
    %v88 = vmul.f32 %v67, %v83
    %v89 = vmul.f32 %v68, %v83
    %v90 = vrot.slane %v84, 4
    %v91 = vadd.f32 %v84, %v90
    %v92 = vrot.slane %v91, 2
    %v93 = vadd.f32 %v91, %v92
    %v94 = vrot.slane %v93, 1
    %v95 = vadd.f32 %v93, %v94
    %v96 = vrot.slane %v85, 4
    %v97 = vadd.f32 %v85, %v96
    %v98 = vrot.slane %v97, 2
    %v99 = vadd.f32 %v97, %v98
    %v100 = vrot.slane %v99, 1
    %v101 = vadd.f32 %v99, %v100
    %vm102 = vcmask 359424
    %v103 = vsel %vm102, %v86, 0.0
    %v104 = vrot.slane %v103, 4
    %v105 = vadd.f32 %v103, %v104
    %v106 = vrot.slane %v105, 2
    %v107 = vadd.f32 %v105, %v106
    %v108 = vrot.slane %v107, 1
    %v109 = vadd.f32 %v107, %v108
    %v110 = vrot.slane %v87, 4
    %v111 = vadd.f32 %v87, %v110
    %v112 = vrot.slane %v111, 2
    %v113 = vadd.f32 %v111, %v112
    %v114 = vrot.slane %v113, 1
    %v115 = vadd.f32 %v113, %v114
    %v116 = vrot.slane %v88, 4
    %v117 = vadd.f32 %v88, %v116
    %v118 = vrot.slane %v117, 2
    %v119 = vadd.f32 %v117, %v118
    %v120 = vrot.slane %v119, 1
    %v121 = vadd.f32 %v119, %v120
    %v122 = vsel %vm102, %v89, 0.0
    %v123 = vrot.slane %v122, 4
    %v124 = vadd.f32 %v122, %v123
    %v125 = vrot.slane %v124, 2
    %v126 = vadd.f32 %v124, %v125
    %v127 = vrot.slane %v126, 1
    %v128 = vadd.f32 %v126, %v127
    %v129 = vld [vmem:[#allocation7] sm:$0xff]
    %v130 = vld [vmem:[#allocation7 + $0x8] sm:$0xff]
    %v131 = vld [vmem:[#allocation7 + $0x10] sm:$0xff]
    %v132 = vld [vmem:[#allocation7 + $0x18] sm:$0xff]
    %v133 = vld [vmem:[#allocation7 + $0x20] sm:$0xff]
    %v134 = vld [vmem:[#allocation7 + $0x28] sm:$0xff]
    %v135 = vld [vmem:[#allocation7 + $0x30] sm:$0xff]
    %v136 = vld [vmem:[#allocation7 + $0x38] sm:$0xff]
    %v137 = vld [vmem:[#allocation7 + $0x40] sm:$0xff]
    %v138 = vld [vmem:[#allocation7 + $0x48] sm:$0xff]
    %v139 = vld [vmem:[#allocation7 + $0x50] sm:$0xff]
    %v140 = vld [vmem:[#allocation7 + $0x58] sm:$0xff]
    %v141 = vld [vmem:[#allocation7 + $0x60] sm:$0xff]
    %v142 = vld [vmem:[#allocation7 + $0x68] sm:$0xff]
    %v143 = vld [vmem:[#allocation7 + $0x70] sm:$0xff]
    %v144 = vld [vmem:[#allocation7 + $0x78] sm:$0xff]
    %v145 = vld [vmem:[#allocation7 + $0x80] sm:$0xff]
    %v146 = vld [vmem:[#allocation7 + $0x88] sm:$0xff]
    %v147 = vld [vmem:[#allocation7 + $0x90] sm:$0xff]
    %v148 = vld [vmem:[#allocation7 + $0x98] sm:$0xff]
    %v149 = vld [vmem:[#allocation7 + $0xa0] sm:$0xff]
    %v150 = vld [vmem:[#allocation7 + $0xa8] sm:$0xff]
    %v151 = vld [vmem:[#allocation7 + $0xb0] sm:$0xff]
    %v152 = vld [vmem:[#allocation7 + $0xb8] sm:$0xff]
    %v153 = vld [vmem:[#allocation7 + $0xc0] sm:$0xff]
    %v154 = vld [vmem:[#allocation7 + $0xc8] sm:$0xff]
    %v155 = vld [vmem:[#allocation7 + $0xd0] sm:$0xff]
    %v156 = vld [vmem:[#allocation7 + $0xd8] sm:$0xff]
    %v157 = vld [vmem:[#allocation7 + $0xe0] sm:$0xff]
    %v158 = vld [vmem:[#allocation7 + $0xe8] sm:$0xff]
    %v159 = vld [vmem:[#allocation7 + $0xf0] sm:$0xff]
    %v160 = vld [vmem:[#allocation7 + $0xf8] sm:$0xff]
    %v161 = vld [vmem:[#allocation7 + $0x100] sm:$0xff]
    %v162 = vld [vmem:[#allocation7 + $0x108] sm:$0xff]
    %v163 = vld [vmem:[#allocation7 + $0x110] sm:$0xff]
    %v164 = vld [vmem:[#allocation7 + $0x118] sm:$0xff]
    %v165 = vld [vmem:[#allocation7 + $0x120] sm:$0xff]
    %v166 = vld [vmem:[#allocation7 + $0x128] sm:$0xf]
    %v167 = vld [vmem:[%s3] sm:$0x1]
    %v169 = vperm.slane %v167, 0
    %vm177 = vcmask 1041409
    %v178 = vsel %vm177, %v115, %v95
    %v179 = vsel %vm177, %v121, %v101
    %v180 = vsel %vm177, %v128, %v109
    %v183 = vsel %vm102, %v180, 0
    %vm185 = vcmask 1043456
    %v187 = vsel %vm185, %v166, 0
    %189 = vmatpush.msra.mxu0 %v144
    %190 = vmatpush.msra.mxu0 %v143
    %191 = vmatpush.msra.mxu0 %v142
    %192 = vmatpush.msra.mxu0 %v141
    %193 = vmatpush.msra.mxu0 %v140
    %194 = vmatpush.msra.mxu0 %v139
    %195 = vmatpush.msra.mxu0 %v138
    %196 = vmatpush.msra.mxu0 %v137
    %197 = vmatpush.msra.mxu0 %v136
    %198 = vmatpush.msra.mxu0 %v135
    %199 = vmatpush.msra.mxu0 %v134
    %200 = vmatpush.msra.mxu0 %v133
    %201 = vmatpush.msra.mxu0 %v132
    %202 = vmatpush.msra.mxu0 %v131
    %203 = vmatpush.msra.mxu0 %v130
    %204 = vmatpush.msra.mxu0 %v129
    %205 = vmatmul.f32.gmra.mxu0 %v178
    %v206 = vpop.f32.mrf.mxu0
    %v207 = vadd.f32 %v169, %v206
    %208 = vdwg.mxu0
    %209 = vmatpush.msra.mxu0 %v160
    %210 = vmatpush.msra.mxu0 %v159
    %211 = vmatpush.msra.mxu0 %v158
    %212 = vmatpush.msra.mxu0 %v157
    %213 = vmatpush.msra.mxu0 %v156
    %214 = vmatpush.msra.mxu0 %v155
    %215 = vmatpush.msra.mxu0 %v154
    %216 = vmatpush.msra.mxu0 %v153
    %217 = vmatpush.msra.mxu0 %v152
    %218 = vmatpush.msra.mxu0 %v151
    %219 = vmatpush.msra.mxu0 %v150
    %220 = vmatpush.msra.mxu0 %v149
    %221 = vmatpush.msra.mxu0 %v148
    %222 = vmatpush.msra.mxu0 %v147
    %223 = vmatpush.msra.mxu0 %v146
    %224 = vmatpush.msra.mxu0 %v145
    %225 = vmatmul.f32.gmra.mxu0 %v179
    %v226 = vpop.f32.mrf.mxu0
    %v227 = vadd.f32 %v207, %v226
    %228 = vdwg.mxu0
    %229 = vmatpush.msra.mxu0 0.0
    %230 = vmatpush.msra.mxu0 0.0
    %231 = vmatpush.msra.mxu0 0.0
    %232 = vmatpush.msra.mxu0 0.0
    %233 = vmatpush.msra.mxu0 0.0
    %234 = vmatpush.msra.mxu0 0.0
    %235 = vmatpush.msra.mxu0 0.0
    %236 = vmatpush.msra.mxu0 0.0
    %237 = vmatpush.msra.mxu0 0.0
    %238 = vmatpush.msra.mxu0 0.0
    %239 = vmatpush.msra.mxu0 %v187
    %240 = vmatpush.msra.mxu0 %v165
    %241 = vmatpush.msra.mxu0 %v164
    %242 = vmatpush.msra.mxu0 %v163
    %243 = vmatpush.msra.mxu0 %v162
    %244 = vmatpush.msra.mxu0 %v161
    %245 = vmatmul.f32.gmra.mxu0 %v183
    %v246 = vpop.f32.mrf.mxu0
    %v247 = vadd.f32 %v227, %v246
    %248 = vdwg.mxu0
    %v249 = vmax.f32 %v247, 0.0
    %250 = vst [vmem:[#allocation8] sm:$0x3] %v249
    // Predicated region
    $region30: #{tpu_custom_call.1} parent=1 // pred_check
      _
    $region31: #{tpu_custom_call.1} parent=1 // pred_check_branch
      %252 = sbr.rel (0) target = $region33
    $region32: #{tpu_custom_call.1} parent=1 // pred_region
      %254 = vsyncadd [#allocation4], 0
      %s256 = sshll.u32 [#allocation8], 4
      %s257 = int_to_ptr.vmem [resolvable:$true] %s256
      %s258 = sshll.u32 %s4, 4
      %s259 = int_to_ptr.hbm [resolvable:$true] %s258
      %261 = dma.vmem_to_hbm [thread:$0]  %s257, 32, %s259, [#allocation4]
    $region33: #{tpu_custom_call.1} parent=1 // pred_fallthru
      _
    // Predicated region
    $region34: #{tpu_custom_call.1} parent=1 // pred_check
      _
    $region35: #{tpu_custom_call.1} parent=1 // pred_check_branch
      %263 = sbr.rel (0) target = $region37
    $region36: #{tpu_custom_call.1} parent=1 // pred_region
      %265 = dma.done [#allocation4], 32
    $region37: #{tpu_custom_call.1} parent=1 // pred_fallthru
      _
    %266 = vsyncpa [#allocation3], 1
    %267 = vsyncpa [#allocation6], 1
    %268 = vsyncpa [#allocation4], 1

// kernel: tpu_custom_call.1
$region0: #{tpu_custom_call.1}
  #allocation0 [shape = 'u32[]', space=smem, size = 0x4, offset = 0x4, fixed_abs, tag = 'smem constant byte address 0x4 - core index']
  #allocation1 [shape = 'u32[72,128]{1,0:T(1,128)}', space=vmem, size = 0x9000, scoped, tag = 'internal scratch']
  %s0 = inlined_call_operand.hbm [shape: f32[2,8,300], index: 0, kind: input, shape index: {}]
  %s1 = inlined_call_operand.vmem [shape: f32[2,8,1], index: 1, kind: input, shape index: {}]
  %s2 = inlined_call_operand.hbm [shape: f32[300,128], index: 2, kind: input, shape index: {}]
  %s3 = inlined_call_operand.vmem [shape: f32[1,128], index: 3, kind: input, shape index: {}]
  %s4 = inlined_call_operand.hbm [shape: f32[2,128], index: 4, kind: output, shape index: {}]
  %s5 = sld [smem:[#allocation0]]
  $region34: #{tpu_custom_call.1} parent=0
    _
  %s7 = ssub.s32 1, %s5
  %s8 = scalar_select 0, %s7, %s5
  $region1: #{tpu_custom_call.1} parent=0
    #allocation2 [shape = 'u8[24576]{0}', space=vmem, size = 0x6000, scoped, tag = 'input window, operand 0, single buffered']
    #allocation3 [shape = 's32[1]{0}', space=sflag, size = 0x4, scoped, tag = 'scoped memory for tpu_custom_call.1']
    #allocation4 [shape = 's32[1]{0}', space=sflag, size = 0x4, scoped, tag = 'scoped memory for tpu_custom_call.1']
    #allocation5 [shape = 'u8[155648]{0}', space=vmem, size = 0x26000, scoped, tag = 'input window, operand 2, single buffered']
    #allocation6 [shape = 's32[1]{0}', space=sflag, size = 0x4, scoped, tag = 'scoped memory for tpu_custom_call.1']
    #allocation7 [shape = 'u8[1024]{0}', space=vmem, size = 0x400, scoped, tag = 'output window, operand 0, single buffered']
    %9 = vsyncpa [#allocation3], 0
    %10 = vsyncpa [#allocation6], 0
    %11 = vsyncpa [#allocation4], 0
    // Predicated region
    $region2: #{tpu_custom_call.1} parent=1 // pred_check
      _
    $region3: #{tpu_custom_call.1} parent=1 // pred_check_branch
      %13 = sbr.rel (0) target = $region5
    $region4: #{tpu_custom_call.1} parent=1 // pred_region
      %15 = vsyncadd [#allocation3], 0
      %s16 = sshll.u32 %s0, 4
      %s17 = int_to_ptr.hbm [resolvable:$true] %s16
      %s18 = sshll.u32 [#allocation2], 4
      %s19 = int_to_ptr.vmem [resolvable:$true] %s18
      %24 = dma.hbm_to_vmem [thread:$0]  %s17, 768, %s19, [#allocation3], 384, 384, 24
    $region5: #{tpu_custom_call.1} parent=1 // pred_fallthru
      _
    // Predicated region
    $region6: #{tpu_custom_call.1} parent=1 // pred_check
      _
    $region7: #{tpu_custom_call.1} parent=1 // pred_check_branch
      %26 = sbr.rel (0) target = $region9
    $region8: #{tpu_custom_call.1} parent=1 // pred_region
      _
    $region9: #{tpu_custom_call.1} parent=1 // pred_fallthru
      _
    // Predicated region
    $region10: #{tpu_custom_call.1} parent=1 // pred_check
      _
    $region11: #{tpu_custom_call.1} parent=1 // pred_check_branch
      %28 = sbr.rel (0) target = $region13
    $region12: #{tpu_custom_call.1} parent=1 // pred_region
      %30 = vsyncadd [#allocation6], 0
      %s31 = sshll.u32 %s2, 4
      %s32 = int_to_ptr.hbm [resolvable:$true] %s31
      %s33 = sshll.u32 [#allocation5], 4
      %s34 = int_to_ptr.vmem [resolvable:$true] %s33
      %39 = dma.hbm_to_vmem [thread:$0]  %s32, 4864, %s34, [#allocation6], 128, 128, 8
    $region13: #{tpu_custom_call.1} parent=1 // pred_fallthru
      _
    // Predicated region
    $region14: #{tpu_custom_call.1} parent=1 // pred_check
      _
    $region15: #{tpu_custom_call.1} parent=1 // pred_check_branch
      %41 = sbr.rel (0) target = $region17
    $region16: #{tpu_custom_call.1} parent=1 // pred_region
      _
    $region17: #{tpu_custom_call.1} parent=1 // pred_fallthru
      _
    // Predicated region
    $region18: #{tpu_custom_call.1} parent=1 // pred_check
      _
    $region19: #{tpu_custom_call.1} parent=1 // pred_check_branch
      %43 = sbr.rel (0) target = $region21
    $region20: #{tpu_custom_call.1} parent=1 // pred_region
      %45 = dma.done [#allocation3], 768
    $region21: #{tpu_custom_call.1} parent=1 // pred_fallthru
      _
    // Predicated region
    $region22: #{tpu_custom_call.1} parent=1 // pred_check
      _
    $region23: #{tpu_custom_call.1} parent=1 // pred_check_branch
      %47 = sbr.rel (0) target = $region25
    $region24: #{tpu_custom_call.1} parent=1 // pred_region
      %49 = dma.done [#allocation6], 4864
    $region25: #{tpu_custom_call.1} parent=1 // pred_fallthru
      _
    %v50 = vld [vmem:[#allocation2] sm:$0xff]
    %v51 = vld [vmem:[#allocation2 + $0x8] sm:$0xff]
    %v52 = vld [vmem:[#allocation2 + $0x10] sm:$0xff]
    %v53 = vld [vmem:[#allocation2 + $0x18] sm:$0xff]
    %v54 = vld [vmem:[#allocation2 + $0x20] sm:$0xff]
    %v55 = vld [vmem:[#allocation2 + $0x28] sm:$0xff]
    %v56 = vld [vmem:[%s1] sm:$0xff]
    %v57 = vld [vmem:[%s1 + $0x8] sm:$0xff]
    %59 = vset.pattern.permute.xlu0 0
    %60 = vperm.xlu0 %59, %v56
    %v61 = vpop.permute.xlu0 %60
    %64 = vset.pattern.permute.xlu0 0
    %65 = vperm.xlu0 %64, %v57
    %v66 = vpop.permute.xlu0 %65
    %v68 = vmul.f32 %v50, %v61
    %v69 = vmul.f32 %v51, %v61
    %v70 = vmul.f32 %v52, %v61
    %v71 = vmul.f32 %v53, %v66
    %v72 = vmul.f32 %v54, %v66
    %v73 = vmul.f32 %v55, %v66
    %v74 = vrot.slane %v68, 4
    %v75 = vadd.f32 %v68, %v74
    %v76 = vrot.slane %v75, 2
    %v77 = vadd.f32 %v75, %v76
    %v78 = vrot.slane %v77, 1
    %v79 = vadd.f32 %v77, %v78
    %v80 = vrot.slane %v69, 4
    %v81 = vadd.f32 %v69, %v80
    %v82 = vrot.slane %v81, 2
    %v83 = vadd.f32 %v81, %v82
    %v84 = vrot.slane %v83, 1
    %v85 = vadd.f32 %v83, %v84
    %vm86 = vcmask 359424
    %v87 = vsel %vm86, %v70, 0.0
    %v88 = vrot.slane %v87, 4
    %v89 = vadd.f32 %v87, %v88
    %v90 = vrot.slane %v89, 2
    %v91 = vadd.f32 %v89, %v90
    %v92 = vrot.slane %v91, 1
    %v93 = vadd.f32 %v91, %v92
    %v94 = vrot.slane %v71, 4
    %v95 = vadd.f32 %v71, %v94
    %v96 = vrot.slane %v95, 2
    %v97 = vadd.f32 %v95, %v96
    %v98 = vrot.slane %v97, 1
    %v99 = vadd.f32 %v97, %v98
    %v100 = vrot.slane %v72, 4
    %v101 = vadd.f32 %v72, %v100
    %v102 = vrot.slane %v101, 2
    %v103 = vadd.f32 %v101, %v102
    %v104 = vrot.slane %v103, 1
    %v105 = vadd.f32 %v103, %v104
    %v106 = vsel %vm86, %v73, 0.0
    %v107 = vrot.slane %v106, 4
    %v108 = vadd.f32 %v106, %v107
    %v109 = vrot.slane %v108, 2
    %v110 = vadd.f32 %v108, %v109
    %v111 = vrot.slane %v110, 1
    %v112 = vadd.f32 %v110, %v111
    %v113 = vld [vmem:[#allocation5] sm:$0xff]
    %v114 = vld [vmem:[#allocation5 + $0x8] sm:$0xff]
    %v115 = vld [vmem:[#allocation5 + $0x10] sm:$0xff]
    %v116 = vld [vmem:[#allocation5 + $0x18] sm:$0xff]
    %v117 = vld [vmem:[#allocation5 + $0x20] sm:$0xff]
    %v118 = vld [vmem:[#allocation5 + $0x28] sm:$0xff]
    %v119 = vld [vmem:[#allocation5 + $0x30] sm:$0xff]
    %v120 = vld [vmem:[#allocation5 + $0x38] sm:$0xff]
    %v121 = vld [vmem:[#allocation5 + $0x40] sm:$0xff]
    %v122 = vld [vmem:[#allocation5 + $0x48] sm:$0xff]
    %v123 = vld [vmem:[#allocation5 + $0x50] sm:$0xff]
    %v124 = vld [vmem:[#allocation5 + $0x58] sm:$0xff]
    %v125 = vld [vmem:[#allocation5 + $0x60] sm:$0xff]
    %v126 = vld [vmem:[#allocation5 + $0x68] sm:$0xff]
    %v127 = vld [vmem:[#allocation5 + $0x70] sm:$0xff]
    %v128 = vld [vmem:[#allocation5 + $0x78] sm:$0xff]
    %v129 = vld [vmem:[#allocation5 + $0x80] sm:$0xff]
    %v130 = vld [vmem:[#allocation5 + $0x88] sm:$0xff]
    %v131 = vld [vmem:[#allocation5 + $0x90] sm:$0xff]
    %v132 = vld [vmem:[#allocation5 + $0x98] sm:$0xff]
    %v133 = vld [vmem:[#allocation5 + $0xa0] sm:$0xff]
    %v134 = vld [vmem:[#allocation5 + $0xa8] sm:$0xff]
    %v135 = vld [vmem:[#allocation5 + $0xb0] sm:$0xff]
    %v136 = vld [vmem:[#allocation5 + $0xb8] sm:$0xff]
    %v137 = vld [vmem:[#allocation5 + $0xc0] sm:$0xff]
    %v138 = vld [vmem:[#allocation5 + $0xc8] sm:$0xff]
    %v139 = vld [vmem:[#allocation5 + $0xd0] sm:$0xff]
    %v140 = vld [vmem:[#allocation5 + $0xd8] sm:$0xff]
    %v141 = vld [vmem:[#allocation5 + $0xe0] sm:$0xff]
    %v142 = vld [vmem:[#allocation5 + $0xe8] sm:$0xff]
    %v143 = vld [vmem:[#allocation5 + $0xf0] sm:$0xff]
    %v144 = vld [vmem:[#allocation5 + $0xf8] sm:$0xff]
    %v145 = vld [vmem:[#allocation5 + $0x100] sm:$0xff]
    %v146 = vld [vmem:[#allocation5 + $0x108] sm:$0xff]
    %v147 = vld [vmem:[#allocation5 + $0x110] sm:$0xff]
    %v148 = vld [vmem:[#allocation5 + $0x118] sm:$0xff]
    %v149 = vld [vmem:[#allocation5 + $0x120] sm:$0xff]
    %v150 = vld [vmem:[#allocation5 + $0x128] sm:$0xf]
    %v151 = vld [vmem:[%s3] sm:$0x1]
    %v153 = vperm.slane %v151, 0
    %vm161 = vcmask 1041409
    %v162 = vsel %vm161, %v99, %v79
    %v163 = vsel %vm161, %v105, %v85
    %v164 = vsel %vm161, %v112, %v93
    %v167 = vsel %vm86, %v164, 0
    %vm169 = vcmask 1043456
    %v171 = vsel %vm169, %v150, 0
    %173 = vmatpush.msra.mxu0 %v128
    %174 = vmatpush.msra.mxu0 %v127
    %175 = vmatpush.msra.mxu0 %v126
    %176 = vmatpush.msra.mxu0 %v125
    %177 = vmatpush.msra.mxu0 %v124
    %178 = vmatpush.msra.mxu0 %v123
    %179 = vmatpush.msra.mxu0 %v122
    %180 = vmatpush.msra.mxu0 %v121
    %181 = vmatpush.msra.mxu0 %v120
    %182 = vmatpush.msra.mxu0 %v119
    %183 = vmatpush.msra.mxu0 %v118
    %184 = vmatpush.msra.mxu0 %v117
    %185 = vmatpush.msra.mxu0 %v116
    %186 = vmatpush.msra.mxu0 %v115
    %187 = vmatpush.msra.mxu0 %v114
    %188 = vmatpush.msra.mxu0 %v113
    %189 = vmatmul.f32.gmra.mxu0 %v162
    %v190 = vpop.f32.mrf.mxu0
    %v191 = vadd.f32 %v153, %v190
    %192 = vdwg.mxu0
    %193 = vmatpush.msra.mxu0 %v144
    %194 = vmatpush.msra.mxu0 %v143
    %195 = vmatpush.msra.mxu0 %v142
    %196 = vmatpush.msra.mxu0 %v141
    %197 = vmatpush.msra.mxu0 %v140
    %198 = vmatpush.msra.mxu0 %v139
    %199 = vmatpush.msra.mxu0 %v138
    %200 = vmatpush.msra.mxu0 %v137
    %201 = vmatpush.msra.mxu0 %v136
    %202 = vmatpush.msra.mxu0 %v135
    %203 = vmatpush.msra.mxu0 %v134
    %204 = vmatpush.msra.mxu0 %v133
    %205 = vmatpush.msra.mxu0 %v132
    %206 = vmatpush.msra.mxu0 %v131
    %207 = vmatpush.msra.mxu0 %v130
    %208 = vmatpush.msra.mxu0 %v129
    %209 = vmatmul.f32.gmra.mxu0 %v163
    %v210 = vpop.f32.mrf.mxu0
    %v211 = vadd.f32 %v191, %v210
    %212 = vdwg.mxu0
    %213 = vmatpush.msra.mxu0 0.0
    %214 = vmatpush.msra.mxu0 0.0
    %215 = vmatpush.msra.mxu0 0.0
    %216 = vmatpush.msra.mxu0 0.0
    %217 = vmatpush.msra.mxu0 0.0
    %218 = vmatpush.msra.mxu0 0.0
    %219 = vmatpush.msra.mxu0 0.0
    %220 = vmatpush.msra.mxu0 0.0
    %221 = vmatpush.msra.mxu0 0.0
    %222 = vmatpush.msra.mxu0 0.0
    %223 = vmatpush.msra.mxu0 %v171
    %224 = vmatpush.msra.mxu0 %v149
    %225 = vmatpush.msra.mxu0 %v148
    %226 = vmatpush.msra.mxu0 %v147
    %227 = vmatpush.msra.mxu0 %v146
    %228 = vmatpush.msra.mxu0 %v145
    %229 = vmatmul.f32.gmra.mxu0 %v167
    %v230 = vpop.f32.mrf.mxu0
    %v231 = vadd.f32 %v211, %v230
    %232 = vdwg.mxu0
    %v233 = vmax.f32 %v231, 0.0
    %234 = vst [vmem:[#allocation7] sm:$0x3] %v233
    // Predicated region
    $region26: #{tpu_custom_call.1} parent=1 // pred_check
      _
    $region27: #{tpu_custom_call.1} parent=1 // pred_check_branch
      %236 = sbr.rel (0) target = $region29
    $region28: #{tpu_custom_call.1} parent=1 // pred_region
      %238 = vsyncadd [#allocation4], 0
      %s240 = sshll.u32 [#allocation7], 4
      %s241 = int_to_ptr.vmem [resolvable:$true] %s240
      %s242 = sshll.u32 %s4, 4
      %s243 = int_to_ptr.hbm [resolvable:$true] %s242
      %245 = dma.vmem_to_hbm [thread:$0]  %s241, 32, %s243, [#allocation4]
    $region29: #{tpu_custom_call.1} parent=1 // pred_fallthru
      _
    // Predicated region
    $region30: #{tpu_custom_call.1} parent=1 // pred_check
      _
    $region31: #{tpu_custom_call.1} parent=1 // pred_check_branch
      %247 = sbr.rel (0) target = $region33
    $region32: #{tpu_custom_call.1} parent=1 // pred_region
      %249 = dma.done [#allocation4], 32
    $region33: #{tpu_custom_call.1} parent=1 // pred_fallthru
      _
    %250 = vsyncpa [#allocation3], 1
    %251 = vsyncpa [#allocation6], 1
    %252 = vsyncpa [#allocation4], 1

</llo_original>
